<compile_context>
chip_gen: v7x
topology: tpu7x:2x2x1
jax: 0.10.0
libtpu: 0.0.40
codegen_flags: <defaults>
</compile_context>

<pallas_src>
import functools

import jax
import jax.numpy as jnp
from jax.experimental import pallas as pl
from jax.experimental.pallas import tpu as pltpu


def _round_up(a: int, b: int) -> int:
    return (a + b - 1) // b * b


def _mlp_gating_kernel(x_ref, wg_ref, wo_ref, gamma_ref, beta_ref, o_ref, *,
                       n_valid: int, eps: float):
    # x_ref:     (tm, D_p)        native dtype (f32 or bf16)
    # wg_ref:    (D_p, D_p)       pre-transposed: x @ wg == PyTorch gate(x)
    # wo_ref:    (D_p, N_p)       pre-transposed
    # gamma_ref: (1, N_p) f32, beta_ref: (1, N_p) f32 (zero in padded lanes)
    # o_ref:     (tm, N_p)
    x = x_ref[...]

    # gating = sigmoid(x @ Wg) -- operands in native dtype, f32 MXU accumulate.
    g = jax.nn.sigmoid(
        jnp.dot(x, wg_ref[...], preferred_element_type=jnp.float32))

    # gated input; cast back to the native dtype so the second matmul also runs
    # at full MXU rate when inputs/weights are bf16.
    h = (x.astype(jnp.float32) * g).astype(x.dtype)
    y = jnp.dot(h, wo_ref[...], preferred_element_type=jnp.float32)

    # LayerNorm over the real (unpadded) n_embd columns. Padded columns of Wo
    # are zero, so y is exactly zero there and contributes nothing to the sums;
    # we only need to divide by n_valid instead of the padded width.
    inv_n = 1.0 / float(n_valid)
    s1 = jnp.sum(y, axis=-1, keepdims=True)
    s2 = jnp.sum(y * y, axis=-1, keepdims=True)
    mean = s1 * inv_n
    var = s2 * inv_n - mean * mean
    inv_std = jax.lax.rsqrt(var + eps)                    # EUP slot
    out = (y - mean) * inv_std
    out = out * gamma_ref[...] + beta_ref[...]            # padded lanes -> 0

    o_ref[...] = out.astype(o_ref.dtype)


def mlp_with_context_gating(x, w_gate, w_oproj, ln_weight, ln_bias, *,
                            tm: int = 256, eps: float = 1e-5):
    """x: (B, T, in_dim). w_gate: (in_dim, in_dim), w_oproj: (n_embd, in_dim)
    in PyTorch (out, in) layout. Returns (B, T, n_embd)."""
    B, T, in_dim = x.shape
    n_embd = w_oproj.shape[0]
    rows = B * T

    dtype = x.dtype
    itemsize = jnp.dtype(dtype).itemsize
    # sublane alignment: 8 for f32, 16 for bf16, 32 for 8-bit types
    row_align = {2: 16, 1: 32}.get(itemsize, 8)

    # Row tile: as large as requested, but no larger than the (aligned) row
    # count so tiny inputs don't waste a 256-row tile.
    tm = _round_up(max(tm, row_align), row_align)
    tm_eff = min(tm, _round_up(rows, row_align))
    rows_p = _round_up(rows, tm_eff)

    # Lane-dense feature dims.
    d_p = _round_up(in_dim, 128)
    n_p = _round_up(n_embd, 128)

    # Layout plumbing in the wrapper: transpose weights to (in, out), cast to
    # the activation dtype, and zero-pad everything to the padded shapes.
    x2 = jnp.pad(x.reshape(rows, in_dim),
                 ((0, rows_p - rows), (0, d_p - in_dim)))
    wg_t = jnp.pad(jnp.asarray(w_gate, dtype=dtype).T,
                   ((0, d_p - in_dim), (0, d_p - in_dim)))
    wo_t = jnp.pad(jnp.asarray(w_oproj, dtype=dtype).T,
                   ((0, d_p - in_dim), (0, n_p - n_embd)))
    gamma = jnp.pad(jnp.asarray(ln_weight, dtype=jnp.float32).reshape(1, n_embd),
                    ((0, 0), (0, n_p - n_embd)))
    beta = jnp.pad(jnp.asarray(ln_bias, dtype=jnp.float32).reshape(1, n_embd),
                   ((0, 0), (0, n_p - n_embd)))

    grid = (rows_p // tm_eff,)

    # VMEM budget: x/out tiles double-buffered + resident weights (the pipeline
    # double-buffers them too even though their block never changes) + margin.
    vmem_est = 2 * tm_eff * (d_p + n_p) * itemsize          # x + out tiles
    vmem_est += 2 * (d_p * d_p + d_p * n_p) * itemsize      # Wg + Wo
    vmem_est += 2 * 2 * n_p * 4                             # gamma + beta (f32)
    vmem_est = int(vmem_est * 1.5) + (4 << 20)
    vmem_limit = min(max(vmem_est, 32 << 20), 100 << 20)

    cost = pl.CostEstimate(
        flops=2 * rows_p * d_p * (d_p + n_p),
        transcendentals=rows_p * d_p + rows_p,
        bytes_accessed=(x2.size + wg_t.size + wo_t.size) * itemsize
                       + (gamma.size + beta.size) * 4
                       + rows_p * n_p * itemsize,
    )

    out2 = pl.pallas_call(
        functools.partial(_mlp_gating_kernel, n_valid=n_embd, eps=eps),
        out_shape=jax.ShapeDtypeStruct((rows_p, n_p), dtype),
        grid_spec=pltpu.PrefetchScalarGridSpec(
            num_scalar_prefetch=0,
            grid=grid,
            in_specs=[
                pl.BlockSpec((tm_eff, d_p), lambda i: (i, 0)),   # x row tile
                pl.BlockSpec((d_p, d_p), lambda i: (0, 0)),      # Wg (resident)
                pl.BlockSpec((d_p, n_p), lambda i: (0, 0)),      # Wo (resident)
                pl.BlockSpec((1, n_p), lambda i: (0, 0)),        # ln gamma
                pl.BlockSpec((1, n_p), lambda i: (0, 0)),        # ln beta
            ],
            out_specs=pl.BlockSpec((tm_eff, n_p), lambda i: (i, 0)),
        ),
        compiler_params=pltpu.CompilerParams(
            dimension_semantics=("parallel",),
            vmem_limit_bytes=vmem_limit),
        cost_estimate=cost,
    )(x2, wg_t, wo_t, gamma, beta)

    return out2[:rows, :n_embd].reshape(B, T, n_embd)


def _reference(x, w_gate, w_oproj, ln_weight, ln_bias, eps=1e-5):
    g = jax.nn.sigmoid(jnp.einsum("btd,od->bto", x, w_gate))
    y = jnp.einsum("btd,od->bto", x * g, w_oproj)
    mean = jnp.mean(y, axis=-1, keepdims=True)
    var = jnp.mean(jnp.square(y - mean), axis=-1, keepdims=True)
    return (y - mean) * jax.lax.rsqrt(var + eps) * ln_weight + ln_bias


if __name__ == "__main__":
    # Small, deterministic shapes; T*B not a multiple of the tile and feature
    # dims not multiples of 128, to exercise the padding paths.
    B, T, in_dim, n_embd = 2, 9, 48, 32

    key = jax.random.PRNGKey(0)
    kx, kg, ko = jax.random.split(key, 3)

    x = jax.random.normal(kx, (B, T, in_dim), dtype=jnp.float32)
    # PyTorch Linear weight layout: (out_features, in_features)
    w_gate = jax.random.normal(kg, (in_dim, in_dim), dtype=jnp.float32) * (1.0 / in_dim ** 0.5)
    w_oproj = jax.random.normal(ko, (n_embd, in_dim), dtype=jnp.float32) * (1.0 / in_dim ** 0.5)
    ln_weight = jnp.ones((n_embd,), dtype=jnp.float32)   # LayerNorm default init
    ln_bias = jnp.zeros((n_embd,), dtype=jnp.float32)

    # f32 path
    out = mlp_with_context_gating(x, w_gate, w_oproj, ln_weight, ln_bias)
    out = jax.block_until_ready(out)
    ref = _reference(x, w_gate, w_oproj, ln_weight, ln_bias)
    assert out.shape == (B, T, n_embd)
    assert jnp.allclose(out, ref, atol=1e-4, rtol=1e-4), (
        float(jnp.max(jnp.abs(out - ref))))

    # bf16 path (full-rate MXU operands, f32 accumulate + f32 LayerNorm)
    xb = x.astype(jnp.bfloat16)
    wgb = w_gate.astype(jnp.bfloat16)
    wob = w_oproj.astype(jnp.bfloat16)
    out_b = mlp_with_context_gating(xb, wgb, wob, ln_weight, ln_bias)
    out_b = jax.block_until_ready(out_b)
    ref_b = _reference(xb.astype(jnp.float32), wgb.astype(jnp.float32),
                       wob.astype(jnp.float32), ln_weight, ln_bias)
    assert out_b.shape == (B, T, n_embd)
    assert bool(jnp.all(jnp.isfinite(out_b.astype(jnp.float32))))
    assert jnp.allclose(out_b.astype(jnp.float32), ref_b, atol=1e-1, rtol=1e-1)

    print("KERNEL_OK")
</pallas_src>

<mosaic_0001>
module attributes {stable_mosaic.version = 11 : i64} {
  func.func @_mlp_gating_kernel(%arg0: i32, %arg1: memref<24x128xf32, #tpu.memory_space<vmem>>, %arg2: memref<128x128xf32, #tpu.memory_space<vmem>>, %arg3: memref<128x128xf32, #tpu.memory_space<vmem>>, %arg4: memref<1x128xf32, #tpu.memory_space<vmem>>, %arg5: memref<1x128xf32, #tpu.memory_space<vmem>>, %arg6: memref<24x128xf32, #tpu.memory_space<vmem>>) attributes {dimension_semantics = [#tpu.dimension_semantics<parallel>], iteration_bounds = array<i64: 1>, scalar_prefetch = 0 : i64, scratch_operands = 0 : i64, tpu.core_type = #tpu.core_type<tc>, window_params = [{transform_indices = @transform_0, window_bounds = array<i64: 24, 128>}, {pipeline_mode = #tpu.pipeline_mode<synchronous>, transform_indices = @transform_1, window_bounds = array<i64: 128, 128>}, {pipeline_mode = #tpu.pipeline_mode<synchronous>, transform_indices = @transform_2, window_bounds = array<i64: 128, 128>}, {pipeline_mode = #tpu.pipeline_mode<synchronous>, transform_indices = @transform_3, window_bounds = array<i64: 1, 128>}, {pipeline_mode = #tpu.pipeline_mode<synchronous>, transform_indices = @transform_4, window_bounds = array<i64: 1, 128>}, {transform_indices = @transform_5, window_bounds = array<i64: 24, 128>}]} {
    %c0 = arith.constant 0 : index
    %c0_0 = arith.constant 0 : index
    %0 = vector.load %arg1[%c0, %c0_0] : memref<24x128xf32, #tpu.memory_space<vmem>>, vector<24x128xf32>
    %c0_1 = arith.constant 0 : index
    %c0_2 = arith.constant 0 : index
    %1 = vector.load %arg2[%c0_1, %c0_2] : memref<128x128xf32, #tpu.memory_space<vmem>>, vector<128x128xf32>
    %cst = arith.constant dense<0.000000e+00> : vector<24x128xf32>
    %2 = tpu.matmul %0, %1, %cst {dimension_numbers = #tpu.dot_dimension_numbers<[1], [0], [0], [1], [0, 0, 1, 1], [], []>} : vector<24x128xf32>, vector<128x128xf32>, vector<24x128xf32> -> vector<24x128xf32>
    %3 = arith.negf %2 : vector<24x128xf32>
    %4 = math.exp %3 : vector<24x128xf32>
    %cst_3 = arith.constant 1.000000e+00 : f32
    %5 = vector.broadcast %cst_3 : f32 to vector<24x128xf32>
    %6 = arith.addf %5, %4 : vector<24x128xf32>
    %7 = arith.divf %5, %6 : vector<24x128xf32>
    %8 = arith.mulf %0, %7 : vector<24x128xf32>
    %c0_4 = arith.constant 0 : index
    %c0_5 = arith.constant 0 : index
    %9 = vector.load %arg3[%c0_4, %c0_5] : memref<128x128xf32, #tpu.memory_space<vmem>>, vector<128x128xf32>
    %cst_6 = arith.constant dense<0.000000e+00> : vector<24x128xf32>
    %10 = tpu.matmul %8, %9, %cst_6 {dimension_numbers = #tpu.dot_dimension_numbers<[1], [0], [0], [1], [0, 0, 1, 1], [], []>} : vector<24x128xf32>, vector<128x128xf32>, vector<24x128xf32> -> vector<24x128xf32>
    %cst_7 = arith.constant dense<0.000000e+00> : vector<24xf32>
    %11 = vector.multi_reduction <add>, %10, %cst_7 [1] : vector<24x128xf32> to vector<24xf32>
    %12 = vector.shape_cast %11 : vector<24xf32> to vector<24x1xf32>
    %13 = arith.mulf %10, %10 : vector<24x128xf32>
    %cst_8 = arith.constant dense<0.000000e+00> : vector<24xf32>
    %14 = vector.multi_reduction <add>, %13, %cst_8 [1] : vector<24x128xf32> to vector<24xf32>
    %15 = vector.shape_cast %14 : vector<24xf32> to vector<24x1xf32>
    %cst_9 = arith.constant 3.125000e-02 : f32
    %16 = vector.broadcast %cst_9 : f32 to vector<24x1xf32>
    %17 = arith.mulf %12, %16 : vector<24x1xf32>
    %cst_10 = arith.constant 3.125000e-02 : f32
    %18 = vector.broadcast %cst_10 : f32 to vector<24x1xf32>
    %19 = arith.mulf %15, %18 : vector<24x1xf32>
    %20 = arith.mulf %17, %17 : vector<24x1xf32>
    %21 = arith.subf %19, %20 : vector<24x1xf32>
    %cst_11 = arith.constant 9.99999974E-6 : f32
    %22 = vector.broadcast %cst_11 : f32 to vector<24x1xf32>
    %23 = arith.addf %21, %22 : vector<24x1xf32>
    %24 = math.rsqrt %23 : vector<24x1xf32>
    %25 = vector.broadcast %17 : vector<24x1xf32> to vector<24x128xf32>
    %26 = arith.subf %10, %25 : vector<24x128xf32>
    %27 = vector.broadcast %24 : vector<24x1xf32> to vector<24x128xf32>
    %28 = arith.mulf %26, %27 : vector<24x128xf32>
    %c0_12 = arith.constant 0 : index
    %c0_13 = arith.constant 0 : index
    %29 = vector.load %arg4[%c0_12, %c0_13] : memref<1x128xf32, #tpu.memory_space<vmem>>, vector<1x128xf32>
    %30 = vector.broadcast %29 : vector<1x128xf32> to vector<24x128xf32>
    %31 = arith.mulf %28, %30 : vector<24x128xf32>
    %c0_14 = arith.constant 0 : index
    %c0_15 = arith.constant 0 : index
    %32 = vector.load %arg5[%c0_14, %c0_15] : memref<1x128xf32, #tpu.memory_space<vmem>>, vector<1x128xf32>
    %33 = vector.broadcast %32 : vector<1x128xf32> to vector<24x128xf32>
    %34 = arith.addf %31, %33 : vector<24x128xf32>
    %c0_16 = arith.constant 0 : index
    %c0_17 = arith.constant 0 : index
    %35 = vector.load %arg6[%c0_16, %c0_17] : memref<24x128xf32, #tpu.memory_space<vmem>>, vector<24x128xf32>
    tpu.vector_store %arg6[%c0_16, %c0_17], %34 {strides = array<i32>} : memref<24x128xf32, #tpu.memory_space<vmem>>, vector<24x128xf32>,
    return
  }
  func.func @transform_0(%arg0: i32) -> (i32, i32) {
    %c0_i32 = arith.constant 0 : i32
    %c0_i32_0 = arith.constant 0 : i32
    return %arg0, %c0_i32 : i32, i32
  }
  func.func @transform_1(%arg0: i32) -> (i32, i32) {
    %c0_i32 = arith.constant 0 : i32
    %c0_i32_0 = arith.constant 0 : i32
    %c0_i32_1 = arith.constant 0 : i32
    return %c0_i32, %c0_i32_0 : i32, i32
  }
  func.func @transform_2(%arg0: i32) -> (i32, i32) {
    %c0_i32 = arith.constant 0 : i32
    %c0_i32_0 = arith.constant 0 : i32
    %c0_i32_1 = arith.constant 0 : i32
    return %c0_i32, %c0_i32_0 : i32, i32
  }
  func.func @transform_3(%arg0: i32) -> (i32, i32) {
    %c0_i32 = arith.constant 0 : i32
    %c0_i32_0 = arith.constant 0 : i32
    %c0_i32_1 = arith.constant 0 : i32
    return %c0_i32, %c0_i32_0 : i32, i32
  }
  func.func @transform_4(%arg0: i32) -> (i32, i32) {
    %c0_i32 = arith.constant 0 : i32
    %c0_i32_0 = arith.constant 0 : i32
    %c0_i32_1 = arith.constant 0 : i32
    return %c0_i32, %c0_i32_0 : i32, i32
  }
  func.func @transform_5(%arg0: i32) -> (i32, i32) {
    %c0_i32 = arith.constant 0 : i32
    %c0_i32_0 = arith.constant 0 : i32
    return %arg0, %c0_i32 : i32, i32
  }
}

</mosaic_0001>

<llo_original>
// kernel: tpu_custom_call.1
$region0: #{tpu_custom_call.1}
  #allocation0 [shape = 'u32[]', space=smem, size = 0x4, offset = 0x4, fixed_abs, tag = 'smem constant byte address 0x4 - core index']
  #allocation1 [shape = 'u32[144,128]{1,0:T(1,128)}', space=vmem, size = 0x12000, scoped, tag = 'internal scratch']
  %s0 = inlined_call_operand.hbm [shape: f32[24,128], index: 0, kind: input, shape index: {}]
  %s1 = inlined_call_operand.hbm [shape: f32[128,128], index: 1, kind: input, shape index: {}]
  %s2 = inlined_call_operand.hbm [shape: f32[128,128], index: 2, kind: input, shape index: {}]
  %s3 = inlined_call_operand.vmem [shape: f32[1,128], index: 3, kind: input, shape index: {}]
  %s4 = inlined_call_operand.vmem [shape: f32[1,128], index: 4, kind: input, shape index: {}]
  %s5 = inlined_call_operand.hbm [shape: f32[24,128], index: 5, kind: output, shape index: {}]
  %s6 = sld [smem:[#allocation0]]
  $region42: #{tpu_custom_call.1} parent=0
    _
  %s8 = ssub.s32 1, %s6
  %s9 = scalar_select 0, %s8, %s6
  $region1: #{tpu_custom_call.1} parent=0
    #allocation2 [shape = 'u8[12288]{0}', space=vmem, size = 0x3000, scoped, tag = 'input window, operand 0, single buffered']
    #allocation3 [shape = 's32[1]{0}', space=sflag, size = 0x4, scoped, tag = 'scoped memory for tpu_custom_call.1']
    #allocation4 [shape = 's32[1]{0}', space=sflag, size = 0x4, scoped, tag = 'scoped memory for tpu_custom_call.1']
    #allocation5 [shape = 'u8[65536]{0}', space=vmem, size = 0x10000, scoped, tag = 'input window, operand 1, single buffered']
    #allocation6 [shape = 's32[1]{0}', space=sflag, size = 0x4, scoped, tag = 'scoped memory for tpu_custom_call.1']
    #allocation7 [shape = 'u8[65536]{0}', space=vmem, size = 0x10000, scoped, tag = 'input window, operand 2, single buffered']
    #allocation8 [shape = 'u8[12288]{0}', space=vmem, size = 0x3000, scoped, tag = 'output window, operand 0, single buffered']
    %10 = vsyncpa [#allocation3], 0
    %11 = vsyncpa [#allocation6], 0
    %12 = vsyncpa [#allocation4], 0
    // Predicated region
    $region2: #{tpu_custom_call.1} parent=1 // pred_check
      _
    $region3: #{tpu_custom_call.1} parent=1 // pred_check_branch
      %14 = sbr.rel (0) target = $region5
    $region4: #{tpu_custom_call.1} parent=1 // pred_region
      %s16 = ssub.s32 384, 384
      %17 = vsyncadd [#allocation3], %s16
      %s18 = sshll.u32 [#allocation2], 4
      %s19 = int_to_ptr.vmem [resolvable:$true] %s18
      %24 = dma.hbm_to_vmem [thread:$0]  %s0, 384, %s19, [#allocation3], 128, 128, 8
    $region5: #{tpu_custom_call.1} parent=1 // pred_fallthru
      _
    // Predicated region
    $region6: #{tpu_custom_call.1} parent=1 // pred_check
      _
    $region7: #{tpu_custom_call.1} parent=1 // pred_check_branch
      %26 = sbr.rel (0) target = $region9
    $region8: #{tpu_custom_call.1} parent=1 // pred_region
      %s28 = ssub.s32 2048, 2048
      %29 = vsyncadd [#allocation6], %s28
      %s30 = sshll.u32 [#allocation5], 4
      %s31 = int_to_ptr.vmem [resolvable:$true] %s30
      %36 = dma.hbm_to_vmem [thread:$0]  %s1, 2048, %s31, [#allocation6], 128, 128, 8
    $region9: #{tpu_custom_call.1} parent=1 // pred_fallthru
      _
    // Predicated region
    $region10: #{tpu_custom_call.1} parent=1 // pred_check
      _
    $region11: #{tpu_custom_call.1} parent=1 // pred_check_branch
      %38 = sbr.rel (0) target = $region13
    $region12: #{tpu_custom_call.1} parent=1 // pred_region
      %s40 = ssub.s32 2048, 2048
      %41 = vsyncadd [#allocation6], %s40
      %s42 = sshll.u32 [#allocation7], 4
      %s43 = int_to_ptr.vmem [resolvable:$true] %s42
      %48 = dma.hbm_to_vmem [thread:$0]  %s2, 2048, %s43, [#allocation6], 128, 128, 8
    $region13: #{tpu_custom_call.1} parent=1 // pred_fallthru
      _
    // Predicated region
    $region14: #{tpu_custom_call.1} parent=1 // pred_check
      _
    $region15: #{tpu_custom_call.1} parent=1 // pred_check_branch
      %50 = sbr.rel (0) target = $region17
    $region16: #{tpu_custom_call.1} parent=1 // pred_region
      _
    $region17: #{tpu_custom_call.1} parent=1 // pred_fallthru
      _
    // Predicated region
    $region18: #{tpu_custom_call.1} parent=1 // pred_check
      _
    $region19: #{tpu_custom_call.1} parent=1 // pred_check_branch
      %52 = sbr.rel (0) target = $region21
    $region20: #{tpu_custom_call.1} parent=1 // pred_region
      _
    $region21: #{tpu_custom_call.1} parent=1 // pred_fallthru
      _
    // Predicated region
    $region22: #{tpu_custom_call.1} parent=1 // pred_check
      _
    $region23: #{tpu_custom_call.1} parent=1 // pred_check_branch
      %54 = sbr.rel (0) target = $region25
    $region24: #{tpu_custom_call.1} parent=1 // pred_region
      %55 = dma.done [#allocation3], 384
    $region25: #{tpu_custom_call.1} parent=1 // pred_fallthru
      _
    // Predicated region
    $region26: #{tpu_custom_call.1} parent=1 // pred_check
      _
    $region27: #{tpu_custom_call.1} parent=1 // pred_check_branch
      %57 = sbr.rel (0) target = $region29
    $region28: #{tpu_custom_call.1} parent=1 // pred_region
      %58 = dma.done [#allocation6], 2048
    $region29: #{tpu_custom_call.1} parent=1 // pred_fallthru
      _
    // Predicated region
    $region30: #{tpu_custom_call.1} parent=1 // pred_check
      _
    $region31: #{tpu_custom_call.1} parent=1 // pred_check_branch
      %60 = sbr.rel (0) target = $region33
    $region32: #{tpu_custom_call.1} parent=1 // pred_region
      %61 = dma.done [#allocation6], 2048
    $region33: #{tpu_custom_call.1} parent=1 // pred_fallthru
      _
    %v62 = vld [vmem:[#allocation2] sm:$0xff]
    %v63 = vld [vmem:[#allocation2 + $0x8] sm:$0xff]
    %v64 = vld [vmem:[#allocation2 + $0x10] sm:$0xff]
    %v65 = vld [vmem:[#allocation5] sm:$0xff]
    %v66 = vld [vmem:[#allocation5 + $0x8] sm:$0xff]
    %v67 = vld [vmem:[#allocation5 + $0x10] sm:$0xff]
    %v68 = vld [vmem:[#allocation5 + $0x18] sm:$0xff]
    %v69 = vld [vmem:[#allocation5 + $0x20] sm:$0xff]
    %v70 = vld [vmem:[#allocation5 + $0x28] sm:$0xff]
    %v71 = vld [vmem:[#allocation5 + $0x30] sm:$0xff]
    %v72 = vld [vmem:[#allocation5 + $0x38] sm:$0xff]
    %v73 = vld [vmem:[#allocation5 + $0x40] sm:$0xff]
    %v74 = vld [vmem:[#allocation5 + $0x48] sm:$0xff]
    %v75 = vld [vmem:[#allocation5 + $0x50] sm:$0xff]
    %v76 = vld [vmem:[#allocation5 + $0x58] sm:$0xff]
    %v77 = vld [vmem:[#allocation5 + $0x60] sm:$0xff]
    %v78 = vld [vmem:[#allocation5 + $0x68] sm:$0xff]
    %v79 = vld [vmem:[#allocation5 + $0x70] sm:$0xff]
    %v80 = vld [vmem:[#allocation5 + $0x78] sm:$0xff]
    %81 = vmatprep.subr.mxu0 0.0
    %82 = vmatpush1.msra.mxu0 %v65
    %83 = vmatprep.subr.mxu0 0.0
    %84 = vmatpush1.msra.mxu0 %v66
    %85 = vmatprep.subr.mxu0 0.0
    %86 = vmatpush1.msra.mxu0 %v67
    %87 = vmatprep.subr.mxu0 0.0
    %88 = vmatpush1.msra.mxu0 %v68
    %89 = vmatprep.subr.mxu0 0.0
    %90 = vmatpush1.msra.mxu0 %v69
    %91 = vmatprep.subr.mxu0 0.0
    %92 = vmatpush1.msra.mxu0 %v70
    %93 = vmatprep.subr.mxu0 0.0
    %94 = vmatpush1.msra.mxu0 %v71
    %95 = vmatprep.subr.mxu0 0.0
    %96 = vmatpush1.msra.mxu0 %v72
    %97 = vmatprep.subr.mxu0 0.0
    %98 = vmatpush1.msra.mxu0 %v73
    %99 = vmatprep.subr.mxu0 0.0
    %100 = vmatpush1.msra.mxu0 %v74
    %101 = vmatprep.subr.mxu0 0.0
    %102 = vmatpush1.msra.mxu0 %v75
    %103 = vmatprep.subr.mxu0 0.0
    %104 = vmatpush1.msra.mxu0 %v76
    %105 = vmatprep.subr.mxu0 0.0
    %106 = vmatpush1.msra.mxu0 %v77
    %107 = vmatprep.subr.mxu0 0.0
    %108 = vmatpush1.msra.mxu0 %v78
    %109 = vmatprep.subr.mxu0 0.0
    %110 = vmatpush1.msra.mxu0 %v79
    %111 = vmatprep.subr.mxu0 0.0
    %112 = vmatpush1.msra.mxu0 %v80
    %113 = vmatprep.subr.mxu0 0.0
    %114 = vmatpush1.msra.mxu0 0.0
    %115 = vmatprep.subr.mxu0 0.0
    %116 = vmatpush1.msra.mxu0 0.0
    %117 = vmatprep.subr.mxu0 0.0
    %118 = vmatpush1.msra.mxu0 0.0
    %119 = vmatprep.subr.mxu0 0.0
    %120 = vmatpush1.msra.mxu0 0.0
    %121 = vmatprep.subr.mxu0 0.0
    %122 = vmatpush1.msra.mxu0 0.0
    %123 = vmatprep.subr.mxu0 0.0
    %124 = vmatpush1.msra.mxu0 0.0
    %125 = vmatprep.subr.mxu0 0.0
    %126 = vmatpush1.msra.mxu0 0.0
    %127 = vmatprep.subr.mxu0 0.0
    %128 = vmatpush1.msra.mxu0 0.0
    %129 = vmatprep.subr.mxu0 0.0
    %130 = vmatpush1.msra.mxu0 0.0
    %131 = vmatprep.subr.mxu0 0.0
    %132 = vmatpush1.msra.mxu0 0.0
    %133 = vmatprep.subr.mxu0 0.0
    %134 = vmatpush1.msra.mxu0 0.0
    %135 = vmatprep.subr.mxu0 0.0
    %136 = vmatpush1.msra.mxu0 0.0
    %137 = vmatprep.subr.mxu0 0.0
    %138 = vmatpush1.msra.mxu0 0.0
    %139 = vmatprep.subr.mxu0 0.0
    %140 = vmatpush1.msra.mxu0 0.0
    %141 = vmatprep.subr.mxu0 0.0
    %142 = vmatpush1.msra.mxu0 0.0
    %143 = vmatprep.subr.mxu0 0.0
    %144 = vmatpush1.msra.mxu0 0.0
    %145 = vmatprep.mubr.f32.mxu0 0.0
    %146 = vmatmul.mubr.f32.gmra.mrb[0].mxu0 %v62
    %v147 = vpop.f32.mrb[0].mxu0
    %v148 = vadd.f32 0.0, %v147
    %v149 = vpop.f32.mrb[0].mxu0
    %150 = vmatprep.mubr.f32.mxu0 0.0
    %151 = vmatmul.mubr.f32.gmra.mrb[0].mxu0 %v63
    %v152 = vpop.f32.mrb[0].mxu0
    %v153 = vadd.f32 0.0, %v152
    %v154 = vpop.f32.mrb[0].mxu0
    %155 = vmatprep.mubr.f32.mxu0 0.0
    %156 = vmatmul.mubr.f32.gmra.mrb[0].mxu0 %v64
    %v157 = vpop.f32.mrb[0].mxu0
    %v158 = vadd.f32 0.0, %v157
    %v159 = vpop.f32.mrb[0].mxu0
    %160 = vdwg.mxu0
    %v161 = vxor.u32 %v148, 2147483648
    %v162 = vxor.u32 %v153, 2147483648
    %v163 = vxor.u32 %v158, 2147483648
    %v164 = vmul.f32 %v161, 1.442695
    %v165 = vpow.pop %v164
    %v166 = vmul.f32 %v162, 1.442695
    %v167 = vpow.pop %v166
    %v168 = vmul.f32 %v163, 1.442695
    %v169 = vpow.pop %v168
    %v170 = vadd.f32 %v165, 1.0
    %v171 = vadd.f32 %v167, 1.0
    %v172 = vadd.f32 %v169, 1.0
    %v173 = vrcp.pop %v170
    %v174 = vmul.f32 1.0, %v173
    %v175 = vrcp.pop %v171
    %v176 = vmul.f32 1.0, %v175
    %v177 = vrcp.pop %v172
    %v178 = vmul.f32 1.0, %v177
    %v179 = vmul.f32 %v62, %v174
    %v180 = vmul.f32 %v63, %v176
    %v181 = vmul.f32 %v64, %v178
    %v182 = vld [vmem:[#allocation7] sm:$0xff]
    %v183 = vld [vmem:[#allocation7 + $0x8] sm:$0xff]
    %v184 = vld [vmem:[#allocation7 + $0x10] sm:$0xff]
    %v185 = vld [vmem:[#allocation7 + $0x18] sm:$0xff]
    %v186 = vld [vmem:[#allocation7 + $0x20] sm:$0xff]
    %v187 = vld [vmem:[#allocation7 + $0x28] sm:$0xff]
    %v188 = vld [vmem:[#allocation7 + $0x30] sm:$0xff]
    %v189 = vld [vmem:[#allocation7 + $0x38] sm:$0xff]
    %v190 = vld [vmem:[#allocation7 + $0x40] sm:$0xff]
    %v191 = vld [vmem:[#allocation7 + $0x48] sm:$0xff]
    %v192 = vld [vmem:[#allocation7 + $0x50] sm:$0xff]
    %v193 = vld [vmem:[#allocation7 + $0x58] sm:$0xff]
    %v194 = vld [vmem:[#allocation7 + $0x60] sm:$0xff]
    %v195 = vld [vmem:[#allocation7 + $0x68] sm:$0xff]
    %v196 = vld [vmem:[#allocation7 + $0x70] sm:$0xff]
    %v197 = vld [vmem:[#allocation7 + $0x78] sm:$0xff]
    %198 = vmatprep.subr.mxu0 0.0
    %199 = vmatpush1.msra.mxu0 %v182
    %200 = vmatprep.subr.mxu0 0.0
    %201 = vmatpush1.msra.mxu0 %v183
    %202 = vmatprep.subr.mxu0 0.0
    %203 = vmatpush1.msra.mxu0 %v184
    %204 = vmatprep.subr.mxu0 0.0
    %205 = vmatpush1.msra.mxu0 %v185
    %206 = vmatprep.subr.mxu0 0.0
    %207 = vmatpush1.msra.mxu0 %v186
    %208 = vmatprep.subr.mxu0 0.0
    %209 = vmatpush1.msra.mxu0 %v187
    %210 = vmatprep.subr.mxu0 0.0
    %211 = vmatpush1.msra.mxu0 %v188
    %212 = vmatprep.subr.mxu0 0.0
    %213 = vmatpush1.msra.mxu0 %v189
    %214 = vmatprep.subr.mxu0 0.0
    %215 = vmatpush1.msra.mxu0 %v190
    %216 = vmatprep.subr.mxu0 0.0
    %217 = vmatpush1.msra.mxu0 %v191
    %218 = vmatprep.subr.mxu0 0.0
    %219 = vmatpush1.msra.mxu0 %v192
    %220 = vmatprep.subr.mxu0 0.0
    %221 = vmatpush1.msra.mxu0 %v193
    %222 = vmatprep.subr.mxu0 0.0
    %223 = vmatpush1.msra.mxu0 %v194
    %224 = vmatprep.subr.mxu0 0.0
    %225 = vmatpush1.msra.mxu0 %v195
    %226 = vmatprep.subr.mxu0 0.0
    %227 = vmatpush1.msra.mxu0 %v196
    %228 = vmatprep.subr.mxu0 0.0
    %229 = vmatpush1.msra.mxu0 %v197
    %230 = vmatprep.subr.mxu0 0.0
    %231 = vmatpush1.msra.mxu0 0.0
    %232 = vmatprep.subr.mxu0 0.0
    %233 = vmatpush1.msra.mxu0 0.0
    %234 = vmatprep.subr.mxu0 0.0
    %235 = vmatpush1.msra.mxu0 0.0
    %236 = vmatprep.subr.mxu0 0.0
    %237 = vmatpush1.msra.mxu0 0.0
    %238 = vmatprep.subr.mxu0 0.0
    %239 = vmatpush1.msra.mxu0 0.0
    %240 = vmatprep.subr.mxu0 0.0
    %241 = vmatpush1.msra.mxu0 0.0
    %242 = vmatprep.subr.mxu0 0.0
    %243 = vmatpush1.msra.mxu0 0.0
    %244 = vmatprep.subr.mxu0 0.0
    %245 = vmatpush1.msra.mxu0 0.0
    %246 = vmatprep.subr.mxu0 0.0
    %247 = vmatpush1.msra.mxu0 0.0
    %248 = vmatprep.subr.mxu0 0.0
    %249 = vmatpush1.msra.mxu0 0.0
    %250 = vmatprep.subr.mxu0 0.0
    %251 = vmatpush1.msra.mxu0 0.0
    %252 = vmatprep.subr.mxu0 0.0
    %253 = vmatpush1.msra.mxu0 0.0
    %254 = vmatprep.subr.mxu0 0.0
    %255 = vmatpush1.msra.mxu0 0.0
    %256 = vmatprep.subr.mxu0 0.0
    %257 = vmatpush1.msra.mxu0 0.0
    %258 = vmatprep.subr.mxu0 0.0
    %259 = vmatpush1.msra.mxu0 0.0
    %260 = vmatprep.subr.mxu0 0.0
    %261 = vmatpush1.msra.mxu0 0.0
    %262 = vmatprep.mubr.f32.mxu0 0.0
    %263 = vmatmul.mubr.f32.gmra.mrb[0].mxu0 %v179
    %v264 = vpop.f32.mrb[0].mxu0
    %v265 = vadd.f32 0.0, %v264
    %v266 = vpop.f32.mrb[0].mxu0
    %267 = vmatprep.mubr.f32.mxu0 0.0
    %268 = vmatmul.mubr.f32.gmra.mrb[0].mxu0 %v180
    %v269 = vpop.f32.mrb[0].mxu0
    %v270 = vadd.f32 0.0, %v269
    %v271 = vpop.f32.mrb[0].mxu0
    %272 = vmatprep.mubr.f32.mxu0 0.0
    %273 = vmatmul.mubr.f32.gmra.mrb[0].mxu0 %v181
    %v274 = vpop.f32.mrb[0].mxu0
    %v275 = vadd.f32 0.0, %v274
    %v276 = vpop.f32.mrb[0].mxu0
    %277 = vdwg.mxu0
    %278 = vadd.xlane.f32.xlu0 %v265
    %v279 = vpop.xlane.xlu0 %278
    %280 = vadd.xlane.f32.xlu0 %v270
    %v281 = vpop.xlane.xlu0 %280
    %282 = vadd.xlane.f32.xlu0 %v275
    %v283 = vpop.xlane.xlu0 %282
    %v284 = vmul.f32 %v265, %v265
    %v285 = vmul.f32 %v270, %v270
    %v286 = vmul.f32 %v275, %v275
    %287 = vadd.xlane.f32.xlu0 %v284
    %v288 = vpop.xlane.xlu0 %287
    %289 = vadd.xlane.f32.xlu0 %v285
    %v290 = vpop.xlane.xlu0 %289
    %291 = vadd.xlane.f32.xlu0 %v286
    %v292 = vpop.xlane.xlu0 %291
    %v293 = vmul.f32 %v279, 0.03125
    %v294 = vmul.f32 %v281, 0.03125
    %v295 = vmul.f32 %v283, 0.03125
    %v296 = vmul.f32 %v288, 0.03125
    %v297 = vmul.f32 %v290, 0.03125
    %v298 = vmul.f32 %v292, 0.03125
    %v299 = vmul.f32 %v293, %v293
    %v300 = vmul.f32 %v294, %v294
    %v301 = vmul.f32 %v295, %v295
    %v302 = vsub.f32 %v296, %v299
    %v303 = vsub.f32 %v297, %v300
    %v304 = vsub.f32 %v298, %v301
    %v305 = vadd.f32 %v302, 1e-05
    %v306 = vadd.f32 %v303, 1e-05
    %v307 = vadd.f32 %v304, 1e-05
    %v308 = vrsqrt.pop %v305
    %v309 = vrsqrt.pop %v306
    %v310 = vrsqrt.pop %v307
    %v311 = vsub.f32 %v265, %v293
    %v312 = vsub.f32 %v270, %v294
    %v313 = vsub.f32 %v275, %v295
    %v314 = vmul.f32 %v311, %v308
    %v315 = vmul.f32 %v312, %v309
    %v316 = vmul.f32 %v313, %v310
    %v317 = vld [vmem:[%s3] sm:$0x1]
    %v319 = vlaneseq
    %v320 = vshrl.u32 %v319, 7
    %v321 = vsub.s32 0, %v320
    %v322 = vrot.slane %v317, %v321
    %v324 = vmul.f32 %v314, %v322
    %v325 = vmul.f32 %v315, %v322
    %v326 = vmul.f32 %v316, %v322
    %v327 = vld [vmem:[%s4] sm:$0x1]
    %v329 = vlaneseq
    %v330 = vshrl.u32 %v329, 7
    %v331 = vsub.s32 0, %v330
    %v332 = vrot.slane %v327, %v331
    %v334 = vadd.f32 %v324, %v332
    %v335 = vadd.f32 %v325, %v332
    %v336 = vadd.f32 %v326, %v332
    %337 = vst [vmem:[#allocation8] sm:$0xff] %v334
    %338 = vst [vmem:[#allocation8 + $0x8] sm:$0xff] %v335
    %339 = vst [vmem:[#allocation8 + $0x10] sm:$0xff] %v336
    // Predicated region
    $region34: #{tpu_custom_call.1} parent=1 // pred_check
      _
    $region35: #{tpu_custom_call.1} parent=1 // pred_check_branch
      %341 = sbr.rel (0) target = $region37
    $region36: #{tpu_custom_call.1} parent=1 // pred_region
      %s343 = ssub.s32 384, 384
      %344 = vsyncadd [#allocation4], %s343
      %s345 = sshll.u32 [#allocation8], 4
      %s346 = int_to_ptr.vmem [resolvable:$true] %s345
      %351 = dma.vmem_to_hbm [thread:$0]  %s346, 384, %s5, [#allocation4], 128, 128, 8
    $region37: #{tpu_custom_call.1} parent=1 // pred_fallthru
      _
    // Predicated region
    $region38: #{tpu_custom_call.1} parent=1 // pred_check
      _
    $region39: #{tpu_custom_call.1} parent=1 // pred_check_branch
      %353 = sbr.rel (0) target = $region41
    $region40: #{tpu_custom_call.1} parent=1 // pred_region
      %354 = dma.done [#allocation4], 384
    $region41: #{tpu_custom_call.1} parent=1 // pred_fallthru
      _
    %355 = vsyncpa [#allocation3], 1
    %356 = vsyncpa [#allocation6], 1
    %357 = vsyncpa [#allocation4], 1

</llo_original>
